<compile_context>
chip_gen: v6e
topology: v6e:2x2x1
jax: 0.10.0
libtpu: 0.0.40
codegen_flags: <defaults>
</compile_context>

<pallas_src>
import numpy as np
import jax
import jax.numpy as jnp
from jax.experimental import pallas as pl
from jax.experimental.pallas import tpu as pltpu

# ----------------------------- problem sizes ------------------------------
QDIM = 4                       # generalized-coordinate dimension
UDIM = 2                       # control-input dimension
H_MLP = 32                     # hidden width of the generic MLP force
H_CA = 32                      # hidden width of the control-affine B(q) net
B = 16                         # batch for the example run

XDIM = QDIM + QDIM + UDIM      # concat([q, v, u]) feature width
HTOT = H_MLP + H_CA            # fused hidden width (one wide matmul)
OUT1 = QDIM                    # MLP-force head width
OUT2 = QDIM * UDIM             # flattened B(q) head width (u-major: j*QDIM + i)
OTOT = OUT1 + OUT2

# packed parameter block (one lane-dense VMEM constant)
P_ROWS = 80                    # >= HTOT + OTOT = 76, multiple of 8 sublanes
P_COLS = 128                   # one full lane tile


# ------------------------------- kernel -----------------------------------
def gen_forces_kernel(xt_ref, p_ref, ft_ref):
    f32 = jnp.float32
    xt = xt_ref[...]                                            # (XDIM, TB), lanes = batch
    p = p_ref[...]                                              # (P_ROWS, P_COLS) packed params

    # static slices of the packed parameter block
    w1t = p[:HTOT, :XDIM]                                       # (HTOT, XDIM)   = w1f^T
    b1t = p[:HTOT, XDIM:XDIM + 1]                               # (HTOT, 1)
    w2t = p[HTOT:HTOT + OTOT, :HTOT]                            # (OTOT, HTOT)   = w2f^T
    b2t = p[HTOT:HTOT + OTOT, HTOT:HTOT + 1]                    # (OTOT, 1)
    dt = p[HTOT:HTOT + QDIM, HTOT + 1:HTOT + 2]                 # (QDIM, 1) damping

    # fused first layer of BOTH force MLPs: one MXU matmul, lane-dense result
    h = jnp.dot(w1t, xt, preferred_element_type=f32) + b1t      # (HTOT, TB)
    h = jnp.maximum(h, 0.0)

    # fused heads: [ MLP-force output ; flattened B(q), u-major ]: one MXU matmul
    out = jnp.dot(w2t, h, preferred_element_type=f32) + b2t     # (OTOT, TB)

    # v and u are sublane slices of the already-loaded x^T block (no extra DMA)
    vt = xt[QDIM:2 * QDIM, :]                                   # (QDIM, TB)
    ut = xt[2 * QDIM:XDIM, :]                                   # (UDIM, TB)

    # force 1 (MLP) + force 3 (viscous damping: -d (*) v), pure VPU
    f = out[:OUT1, :] - dt * vt                                 # (QDIM, TB)

    # force 2 (control-affine): F_ca[i, b] = sum_j B(q)[b, i, j] * u[b, j]
    # unrolled over UDIM with sublane slices — no cross-lane work
    for j in range(UDIM):
        bj = out[OUT1 + j * QDIM: OUT1 + (j + 1) * QDIM, :]     # (QDIM, TB)
        f = f + bj * ut[j:j + 1, :]

    ft_ref[...] = f                                             # lane-dense store


# ------------------------------- wrapper -----------------------------------
def _pick_tb(bsz):
    # single step for small/medium batches (kills per-step pipeline overhead);
    # for large batches: big lane-dense tiles (multiple of 128), capped at 8192,
    # and at least 2 steps so both v7x TensorCores get work.
    if bsz <= 1024:
        return bsz
    half = (bsz // 2 // 128) * 128
    return max(128, min(8192, half))


def generalized_forces(q, v, u, packed_params):
    bsz = q.shape[0]

    # batch -> lanes: single transposed, lane-contiguous kernel input
    x_t = jnp.concatenate([q, v, u], axis=1).T.astype(jnp.float32)   # (XDIM, bsz)

    tb = _pick_tb(bsz)
    steps = -(-bsz // tb)
    padded = steps * tb
    if padded != bsz:                                                # ragged batch: pad lanes
        x_t = jnp.pad(x_t, ((0, 0), (0, padded - bsz)))

    ft = pl.pallas_call(
        gen_forces_kernel,
        out_shape=jax.ShapeDtypeStruct((QDIM, padded), jnp.float32),
        grid=(steps,),
        in_specs=[
            pl.BlockSpec((XDIM, tb), lambda b: (0, b)),              # x^T tile (batch on lanes)
            pl.BlockSpec((P_ROWS, P_COLS), lambda b: (0, 0)),        # packed params (resident)
        ],
        out_specs=pl.BlockSpec((QDIM, tb), lambda b: (0, b)),
        compiler_params=pltpu.CompilerParams(
            dimension_semantics=("parallel",) if steps > 1 else ("arbitrary",)),
    )(x_t, packed_params)

    return ft[:, :bsz].T.reshape(bsz, QDIM, 1)


# ---------------------------- pure-JAX reference ----------------------------
def reference(q, v, u, raw_params):
    (w1m, b1m, w2m, b2m, w1c, b1c, w2c, b2c, d) = raw_params
    bsz = q.shape[0]
    F = jnp.zeros((bsz, QDIM, 1), jnp.float32)

    # force 1: MLP on concat([q, v, u])
    x = jnp.concatenate([q, v, u], axis=1)
    h = jax.nn.relu(x @ w1m + b1m)
    F = F + (h @ w2m + b2m)[..., None]

    # force 2: control-affine B(q) @ u  (flat head is u-major: [:, j*QDIM + i] = B[:, i, j])
    hc = jax.nn.relu(q @ w1c + b1c)
    bflat = hc @ w2c + b2c
    bmat = bflat.reshape(bsz, UDIM, QDIM)                        # [b, j, i]
    F = F + jnp.einsum('bji,bj->bi', bmat, u)[..., None]

    # force 3: viscous joint damping
    F = F + (-(d * v))[..., None]
    return F


# ------------------------------ param setup --------------------------------
def make_params(key):
    ks = jax.random.split(key, 9)
    s = 0.2
    w1m = s * jax.random.normal(ks[0], (XDIM, H_MLP), jnp.float32)
    b1m = s * jax.random.normal(ks[1], (1, H_MLP), jnp.float32)
    w2m = s * jax.random.normal(ks[2], (H_MLP, QDIM), jnp.float32)
    b2m = s * jax.random.normal(ks[3], (1, QDIM), jnp.float32)
    w1c = s * jax.random.normal(ks[4], (QDIM, H_CA), jnp.float32)
    b1c = s * jax.random.normal(ks[5], (1, H_CA), jnp.float32)
    w2c = s * jax.random.normal(ks[6], (H_CA, OUT2), jnp.float32)
    b2c = s * jax.random.normal(ks[7], (1, OUT2), jnp.float32)
    d = jax.nn.softplus(jax.random.normal(ks[8], (1, QDIM), jnp.float32))  # positive damping

    raw = (w1m, b1m, w2m, b2m, w1c, b1c, w2c, b2c, d)

    # one-time host-side fusion: one wide matmul per layer in the kernel
    w1f = jnp.zeros((XDIM, HTOT), jnp.float32)
    w1f = w1f.at[:, :H_MLP].set(w1m)          # MLP force sees all of [q, v, u]
    w1f = w1f.at[:QDIM, H_MLP:].set(w1c)      # CA net sees only q (rest stays zero)
    b1f = jnp.concatenate([b1m, b1c], axis=1)

    w2f = jnp.zeros((HTOT, OTOT), jnp.float32)  # block-diagonal second layer
    w2f = w2f.at[:H_MLP, :OUT1].set(w2m)
    w2f = w2f.at[H_MLP:, OUT1:].set(w2c)
    b2f = jnp.concatenate([b2m, b2c], axis=1)

    # pack everything (already transposed for the batch-on-lanes layout) into one
    # lane-dense (P_ROWS, P_COLS) constant block:
    #   rows [0, HTOT)        : [ w1f^T | b1f^T ]
    #   rows [HTOT, HTOT+OTOT): [ w2f^T | b2f^T | d^T (first QDIM rows) ]
    packed = jnp.zeros((P_ROWS, P_COLS), jnp.float32)
    packed = packed.at[:HTOT, :XDIM].set(w1f.T)
    packed = packed.at[:HTOT, XDIM].set(b1f[0, :])
    packed = packed.at[HTOT:HTOT + OTOT, :HTOT].set(w2f.T)
    packed = packed.at[HTOT:HTOT + OTOT, HTOT].set(b2f[0, :])
    packed = packed.at[HTOT:HTOT + QDIM, HTOT + 1].set(d[0, :])

    return raw, packed


if __name__ == "__main__":
    key = jax.random.PRNGKey(0)
    kq, kv, ku, kp = jax.random.split(key, 4)
    q = jax.random.normal(kq, (B, QDIM), jnp.float32)
    v = jax.random.normal(kv, (B, QDIM), jnp.float32)
    u = jax.random.normal(ku, (B, UDIM), jnp.float32)
    raw_params, packed_params = make_params(kp)

    F = generalized_forces(q, v, u, packed_params)
    F = jax.block_until_ready(F)

    F_ref = reference(q, v, u, raw_params)
    assert F.shape == (B, QDIM, 1)
    np.testing.assert_allclose(np.asarray(F), np.asarray(F_ref), rtol=1e-4, atol=1e-4)
    print("KERNEL_OK")
</pallas_src>

<mosaic_0001>
module attributes {stable_mosaic.version = 11 : i64} {
  func.func @gen_forces_kernel(%arg0: i32, %arg1: memref<10x16xf32, #tpu.memory_space<vmem>>, %arg2: memref<80x128xf32, #tpu.memory_space<vmem>>, %arg3: memref<4x16xf32, #tpu.memory_space<vmem>>) attributes {dimension_semantics = [#tpu.dimension_semantics<arbitrary>], iteration_bounds = array<i64: 1>, scalar_prefetch = 0 : i64, scratch_operands = 0 : i64, tpu.core_type = #tpu.core_type<tc>, window_params = [{transform_indices = @transform_0, window_bounds = array<i64: 10, 16>}, {pipeline_mode = #tpu.pipeline_mode<synchronous>, transform_indices = @transform_1, window_bounds = array<i64: 80, 128>}, {transform_indices = @transform_2, window_bounds = array<i64: 4, 16>}]} {
    %c0 = arith.constant 0 : index
    %c0_0 = arith.constant 0 : index
    %0 = vector.load %arg1[%c0, %c0_0] : memref<10x16xf32, #tpu.memory_space<vmem>>, vector<10x16xf32>
    %c0_1 = arith.constant 0 : index
    %c0_2 = arith.constant 0 : index
    %1 = vector.load %arg2[%c0_1, %c0_2] : memref<80x128xf32, #tpu.memory_space<vmem>>, vector<80x128xf32>
    %2 = vector.extract_strided_slice %1 {offsets = [0, 0], sizes = [64, 10], strides = [1, 1]} : vector<80x128xf32> to vector<64x10xf32>
    %3 = vector.extract_strided_slice %1 {offsets = [0, 10], sizes = [64, 1], strides = [1, 1]} : vector<80x128xf32> to vector<64x1xf32>
    %4 = vector.extract_strided_slice %1 {offsets = [64, 0], sizes = [12, 64], strides = [1, 1]} : vector<80x128xf32> to vector<12x64xf32>
    %5 = vector.extract_strided_slice %1 {offsets = [64, 64], sizes = [12, 1], strides = [1, 1]} : vector<80x128xf32> to vector<12x1xf32>
    %6 = vector.extract_strided_slice %1 {offsets = [64, 65], sizes = [4, 1], strides = [1, 1]} : vector<80x128xf32> to vector<4x1xf32>
    %cst = arith.constant dense<0.000000e+00> : vector<64x16xf32>
    %7 = tpu.matmul %2, %0, %cst {dimension_numbers = #tpu.dot_dimension_numbers<[1], [0], [0], [1], [0, 0, 1, 1], [], []>} : vector<64x10xf32>, vector<10x16xf32>, vector<64x16xf32> -> vector<64x16xf32>
    %8 = vector.broadcast %3 : vector<64x1xf32> to vector<64x16xf32>
    %9 = arith.addf %7, %8 : vector<64x16xf32>
    %cst_3 = arith.constant 0.000000e+00 : f32
    %10 = vector.broadcast %cst_3 : f32 to vector<64x16xf32>
    %11 = arith.maximumf %9, %10 : vector<64x16xf32>
    %cst_4 = arith.constant dense<0.000000e+00> : vector<12x16xf32>
    %12 = tpu.matmul %4, %11, %cst_4 {dimension_numbers = #tpu.dot_dimension_numbers<[1], [0], [0], [1], [0, 0, 1, 1], [], []>} : vector<12x64xf32>, vector<64x16xf32>, vector<12x16xf32> -> vector<12x16xf32>
    %13 = vector.broadcast %5 : vector<12x1xf32> to vector<12x16xf32>
    %14 = arith.addf %12, %13 : vector<12x16xf32>
    %15 = vector.extract_strided_slice %0 {offsets = [4, 0], sizes = [4, 16], strides = [1, 1]} : vector<10x16xf32> to vector<4x16xf32>
    %16 = vector.extract_strided_slice %0 {offsets = [8, 0], sizes = [2, 16], strides = [1, 1]} : vector<10x16xf32> to vector<2x16xf32>
    %17 = vector.extract_strided_slice %14 {offsets = [0, 0], sizes = [4, 16], strides = [1, 1]} : vector<12x16xf32> to vector<4x16xf32>
    %18 = vector.broadcast %6 : vector<4x1xf32> to vector<4x16xf32>
    %19 = arith.mulf %18, %15 : vector<4x16xf32>
    %20 = arith.subf %17, %19 : vector<4x16xf32>
    %21 = vector.extract_strided_slice %14 {offsets = [4, 0], sizes = [4, 16], strides = [1, 1]} : vector<12x16xf32> to vector<4x16xf32>
    %22 = vector.extract_strided_slice %16 {offsets = [0, 0], sizes = [1, 16], strides = [1, 1]} : vector<2x16xf32> to vector<1x16xf32>
    %23 = vector.broadcast %22 : vector<1x16xf32> to vector<4x16xf32>
    %24 = arith.mulf %21, %23 : vector<4x16xf32>
    %25 = arith.addf %20, %24 : vector<4x16xf32>
    %26 = vector.extract_strided_slice %14 {offsets = [8, 0], sizes = [4, 16], strides = [1, 1]} : vector<12x16xf32> to vector<4x16xf32>
    %27 = vector.extract_strided_slice %16 {offsets = [1, 0], sizes = [1, 16], strides = [1, 1]} : vector<2x16xf32> to vector<1x16xf32>
    %28 = vector.broadcast %27 : vector<1x16xf32> to vector<4x16xf32>
    %29 = arith.mulf %26, %28 : vector<4x16xf32>
    %30 = arith.addf %25, %29 : vector<4x16xf32>
    %c0_5 = arith.constant 0 : index
    %c0_6 = arith.constant 0 : index
    %31 = vector.load %arg3[%c0_5, %c0_6] : memref<4x16xf32, #tpu.memory_space<vmem>>, vector<4x16xf32>
    tpu.vector_store %arg3[%c0_5, %c0_6], %30 {strides = array<i32>} : memref<4x16xf32, #tpu.memory_space<vmem>>, vector<4x16xf32>,
    return
  }
  func.func @transform_0(%arg0: i32) -> (i32, i32) {
    %c0_i32 = arith.constant 0 : i32
    %c0_i32_0 = arith.constant 0 : i32
    return %c0_i32, %arg0 : i32, i32
  }
  func.func @transform_1(%arg0: i32) -> (i32, i32) {
    %c0_i32 = arith.constant 0 : i32
    %c0_i32_0 = arith.constant 0 : i32
    %c0_i32_1 = arith.constant 0 : i32
    return %c0_i32, %c0_i32_0 : i32, i32
  }
  func.func @transform_2(%arg0: i32) -> (i32, i32) {
    %c0_i32 = arith.constant 0 : i32
    %c0_i32_0 = arith.constant 0 : i32
    return %c0_i32, %arg0 : i32, i32
  }
}

</mosaic_0001>

<llo_original>
// kernel: tpu_custom_call.1
$region0: #{tpu_custom_call.1}
  #allocation0 [shape = 'u32[]', space=smem, size = 0x4, offset = 0x4, fixed_abs, tag = 'smem constant byte address 0x4 - core index']
  #allocation1 [shape = 'u32[144,128]{1,0:T(1,128)}', space=vmem, size = 0x12000, scoped, tag = 'internal scratch']
  %s0 = inlined_call_operand.hbm [shape: f32[10,16], index: 0, kind: input, shape index: {}]
  %s1 = inlined_call_operand.hbm [shape: f32[80,128], index: 1, kind: input, shape index: {}]
  %s2 = inlined_call_operand.hbm [shape: f32[4,16], index: 2, kind: output, shape index: {}]
  %s3 = sld [smem:[#allocation0]]
  $region26: #{tpu_custom_call.1} parent=0
    _
  %s5 = ssub.s32 1, %s3
  %s6 = scalar_select 0, %s5, %s3
  $region1: #{tpu_custom_call.1} parent=0
    #allocation2 [shape = 'u8[8192]{0}', space=vmem, size = 0x2000, scoped, tag = 'input window, operand 0, single buffered']
    #allocation3 [shape = 's32[1]{0}', space=sflag, size = 0x4, scoped, tag = 'scoped memory for tpu_custom_call.1']
    #allocation4 [shape = 's32[1]{0}', space=sflag, size = 0x4, scoped, tag = 'scoped memory for tpu_custom_call.1']
    #allocation5 [shape = 'u8[40960]{0}', space=vmem, size = 0xa000, scoped, tag = 'input window, operand 1, single buffered']
    #allocation6 [shape = 's32[1]{0}', space=sflag, size = 0x4, scoped, tag = 'scoped memory for tpu_custom_call.1']
    #allocation7 [shape = 'u8[2048]{0}', space=vmem, size = 0x800, scoped, tag = 'output window, operand 0, single buffered']
    %7 = vsyncpa [#allocation3], 0
    %8 = vsyncpa [#allocation6], 0
    %9 = vsyncpa [#allocation4], 0
    // Predicated region
    $region2: #{tpu_custom_call.1} parent=1 // pred_check
      _
    $region3: #{tpu_custom_call.1} parent=1 // pred_check_branch
      %11 = sbr.rel (0) target = $region5
    $region4: #{tpu_custom_call.1} parent=1 // pred_region
      %s13 = ssub.s32 256, 256
      %14 = vsyncadd [#allocation3], %s13
      %s15 = sshll.u32 [#allocation2], 4
      %s16 = int_to_ptr.vmem [resolvable:$true] %s15
      %21 = dma.hbm_to_vmem [thread:$0]  %s0, 256, %s16, [#allocation3], 128, 128, 8
    $region5: #{tpu_custom_call.1} parent=1 // pred_fallthru
      _
    // Predicated region
    $region6: #{tpu_custom_call.1} parent=1 // pred_check
      _
    $region7: #{tpu_custom_call.1} parent=1 // pred_check_branch
      %23 = sbr.rel (0) target = $region9
    $region8: #{tpu_custom_call.1} parent=1 // pred_region
      %s25 = ssub.s32 1280, 1280
      %26 = vsyncadd [#allocation6], %s25
      %s27 = sshll.u32 [#allocation5], 4
      %s28 = int_to_ptr.vmem [resolvable:$true] %s27
      %33 = dma.hbm_to_vmem [thread:$0]  %s1, 1280, %s28, [#allocation6], 128, 128, 8
    $region9: #{tpu_custom_call.1} parent=1 // pred_fallthru
      _
    // Predicated region
    $region10: #{tpu_custom_call.1} parent=1 // pred_check
      _
    $region11: #{tpu_custom_call.1} parent=1 // pred_check_branch
      %35 = sbr.rel (0) target = $region13
    $region12: #{tpu_custom_call.1} parent=1 // pred_region
      %36 = dma.done [#allocation3], 256
    $region13: #{tpu_custom_call.1} parent=1 // pred_fallthru
      _
    // Predicated region
    $region14: #{tpu_custom_call.1} parent=1 // pred_check
      _
    $region15: #{tpu_custom_call.1} parent=1 // pred_check_branch
      %38 = sbr.rel (0) target = $region17
    $region16: #{tpu_custom_call.1} parent=1 // pred_region
      %39 = dma.done [#allocation6], 1280
    $region17: #{tpu_custom_call.1} parent=1 // pred_fallthru
      _
    %v40 = vld [vmem:[#allocation2] sm:$0xff]
    %v41 = vld [vmem:[#allocation2 + $0x8] sm:$0x3]
    %v42 = vld [vmem:[#allocation5] sm:$0xff]
    %v43 = vld [vmem:[#allocation5 + $0x8] sm:$0xff]
    %v44 = vld [vmem:[#allocation5 + $0x10] sm:$0xff]
    %v45 = vld [vmem:[#allocation5 + $0x18] sm:$0xff]
    %v46 = vld [vmem:[#allocation5 + $0x20] sm:$0xff]
    %v47 = vld [vmem:[#allocation5 + $0x28] sm:$0xff]
    %v48 = vld [vmem:[#allocation5 + $0x30] sm:$0xff]
    %v49 = vld [vmem:[#allocation5 + $0x38] sm:$0xff]
    %v50 = vld [vmem:[#allocation5 + $0x40] sm:$0xff]
    %v51 = vld [vmem:[#allocation5 + $0x48] sm:$0xff]
    %53 = vset.pattern.permute.xlu0 10
    %54 = vperm.xlu0 %53, %v42
    %v55 = vpop.permute.xlu0 %54
    %58 = vset.pattern.permute.xlu0 10
    %59 = vperm.xlu0 %58, %v43
    %v60 = vpop.permute.xlu0 %59
    %63 = vset.pattern.permute.xlu0 10
    %64 = vperm.xlu0 %63, %v44
    %v65 = vpop.permute.xlu0 %64
    %68 = vset.pattern.permute.xlu0 10
    %69 = vperm.xlu0 %68, %v45
    %v70 = vpop.permute.xlu0 %69
    %73 = vset.pattern.permute.xlu0 10
    %74 = vperm.xlu0 %73, %v46
    %v75 = vpop.permute.xlu0 %74
    %78 = vset.pattern.permute.xlu0 10
    %79 = vperm.xlu0 %78, %v47
    %v80 = vpop.permute.xlu0 %79
    %83 = vset.pattern.permute.xlu0 10
    %84 = vperm.xlu0 %83, %v48
    %v85 = vpop.permute.xlu0 %84
    %88 = vset.pattern.permute.xlu0 10
    %89 = vperm.xlu0 %88, %v49
    %v90 = vpop.permute.xlu0 %89
    %vm92 = vcmask 80896
    %v93 = vsel %vm92, %v42, 0
    %v95 = vsel %vm92, %v43, 0
    %v97 = vsel %vm92, %v44, 0
    %v99 = vsel %vm92, %v45, 0
    %v101 = vsel %vm92, %v46, 0
    %v103 = vsel %vm92, %v47, 0
    %v105 = vsel %vm92, %v48, 0
    %v107 = vsel %vm92, %v49, 0
    %vm109 = vcmask 1041408
    %v111 = vsel %vm109, %v41, 0
    %113 = vmatprep.subr.mxu0 0.0
    %114 = vmatpush1.msra.mxu0 0.0
    %115 = vmatprep.subr.mxu0 0.0
    %116 = vmatpush1.msra.mxu0 0.0
    %117 = vmatprep.subr.mxu0 0.0
    %118 = vmatpush1.msra.mxu0 0.0
    %119 = vmatprep.subr.mxu0 0.0
    %120 = vmatpush1.msra.mxu0 0.0
    %121 = vmatprep.subr.mxu0 0.0
    %122 = vmatpush1.msra.mxu0 0.0
    %123 = vmatprep.subr.mxu0 0.0
    %124 = vmatpush1.msra.mxu0 0.0
    %125 = vmatprep.subr.mxu0 0.0
    %126 = vmatpush1.msra.mxu0 0.0
    %127 = vmatprep.subr.mxu0 0.0
    %128 = vmatpush1.msra.mxu0 0.0
    %129 = vmatprep.subr.mxu0 0.0
    %130 = vmatpush1.msra.mxu0 0.0
    %131 = vmatprep.subr.mxu0 0.0
    %132 = vmatpush1.msra.mxu0 0.0
    %133 = vmatprep.subr.mxu0 0.0
    %134 = vmatpush1.msra.mxu0 0.0
    %135 = vmatprep.subr.mxu0 0.0
    %136 = vmatpush1.msra.mxu0 0.0
    %137 = vmatprep.subr.mxu0 0.0
    %138 = vmatpush1.msra.mxu0 0.0
    %139 = vmatprep.subr.mxu0 0.0
    %140 = vmatpush1.msra.mxu0 0.0
    %141 = vmatprep.subr.mxu0 0.0
    %142 = vmatpush1.msra.mxu0 %v111
    %143 = vmatprep.subr.mxu0 0.0
    %144 = vmatpush1.msra.mxu0 %v40
    %145 = vmatprep.subr.mxu0 0.0
    %146 = vmatpush2.msra.mxu0 0.0
    %147 = vmatprep.subr.mxu0 0.0
    %148 = vmatpush2.msra.mxu0 0.0
    %149 = vmatprep.subr.mxu0 0.0
    %150 = vmatpush2.msra.mxu0 0.0
    %151 = vmatprep.subr.mxu0 0.0
    %152 = vmatpush2.msra.mxu0 0.0
    %153 = vmatprep.subr.mxu0 0.0
    %154 = vmatpush2.msra.mxu0 0.0
    %155 = vmatprep.subr.mxu0 0.0
    %156 = vmatpush2.msra.mxu0 0.0
    %157 = vmatprep.subr.mxu0 0.0
    %158 = vmatpush2.msra.mxu0 0.0
    %159 = vmatprep.subr.mxu0 0.0
    %160 = vmatpush2.msra.mxu0 0.0
    %161 = vmatprep.subr.mxu0 0.0
    %162 = vmatpush2.msra.mxu0 0.0
    %163 = vmatprep.subr.mxu0 0.0
    %164 = vmatpush2.msra.mxu0 0.0
    %165 = vmatprep.subr.mxu0 0.0
    %166 = vmatpush2.msra.mxu0 0.0
    %167 = vmatprep.subr.mxu0 0.0
    %168 = vmatpush2.msra.mxu0 0.0
    %169 = vmatprep.subr.mxu0 0.0
    %170 = vmatpush2.msra.mxu0 0.0
    %171 = vmatprep.subr.mxu0 0.0
    %172 = vmatpush2.msra.mxu0 0.0
    %173 = vmatprep.subr.mxu0 0.0
    %174 = vmatpush2.msra.mxu0 0.0
    %175 = vmatprep.subr.mxu0 0.0
    %176 = vmatpush2.msra.mxu0 0.0
    %177 = vmatprep.mubr.f32.mxu0 0.0
    %178 = vmatmul.mubr.f32.gmra.mxu0 %v93
    %v179 = vpop.f32.mrf.mxu0
    %v180 = vadd.f32 %v55, %v179
    %v181 = vpop.f32.mrf.mxu0
    %182 = vmatprep.mubr.f32.mxu0 0.0
    %183 = vmatmul.mubr.f32.gmra.mxu0 %v95
    %v184 = vpop.f32.mrf.mxu0
    %v185 = vadd.f32 %v60, %v184
    %v186 = vpop.f32.mrf.mxu0
    %187 = vmatprep.mubr.f32.mxu0 0.0
    %188 = vmatmul.mubr.f32.gmra.mxu0 %v97
    %v189 = vpop.f32.mrf.mxu0
    %v190 = vadd.f32 %v65, %v189
    %v191 = vpop.f32.mrf.mxu0
    %192 = vmatprep.mubr.f32.mxu0 0.0
    %193 = vmatmul.mubr.f32.gmra.mxu0 %v99
    %v194 = vpop.f32.mrf.mxu0
    %v195 = vadd.f32 %v70, %v194
    %v196 = vpop.f32.mrf.mxu0
    %197 = vmatprep.mubr.f32.mxu0 0.0
    %198 = vmatmul.mubr.f32.gmra.mxu0 %v101
    %v199 = vpop.f32.mrf.mxu0
    %v200 = vadd.f32 %v75, %v199
    %v201 = vpop.f32.mrf.mxu0
    %202 = vmatprep.mubr.f32.mxu0 0.0
    %203 = vmatmul.mubr.f32.gmra.mxu0 %v103
    %v204 = vpop.f32.mrf.mxu0
    %v205 = vadd.f32 %v80, %v204
    %v206 = vpop.f32.mrf.mxu0
    %207 = vmatprep.mubr.f32.mxu0 0.0
    %208 = vmatmul.mubr.f32.gmra.mxu0 %v105
    %v209 = vpop.f32.mrf.mxu0
    %v210 = vadd.f32 %v85, %v209
    %v211 = vpop.f32.mrf.mxu0
    %212 = vmatprep.mubr.f32.mxu0 0.0
    %213 = vmatmul.mubr.f32.gmra.mxu0 %v107
    %v214 = vpop.f32.mrf.mxu0
    %v215 = vadd.f32 %v90, %v214
    %v216 = vpop.f32.mrf.mxu0
    %217 = vdwg.mxu0
    %v218 = vmax.f32 %v180, 0.0
    %v219 = vmax.f32 %v185, 0.0
    %v220 = vmax.f32 %v190, 0.0
    %v221 = vmax.f32 %v195, 0.0
    %v222 = vmax.f32 %v200, 0.0
    %v223 = vmax.f32 %v205, 0.0
    %v224 = vmax.f32 %v210, 0.0
    %v225 = vmax.f32 %v215, 0.0
    %227 = vset.pattern.permute.xlu0 64
    %228 = vperm.xlu0 %227, %v50
    %v229 = vpop.permute.xlu0 %228
    %232 = vset.pattern.permute.xlu0 64
    %233 = vperm.xlu0 %232, %v51
    %v234 = vpop.permute.xlu0 %233
    %vm236 = vcmask 523264
    %v237 = vsel %vm236, %v50, 0
    %v239 = vsel %vm236, %v51, 0
    %241 = vmatprep.subr.mxu0 0.0
    %242 = vmatpush1.msra.mxu0 0.0
    %243 = vmatprep.subr.mxu0 0.0
    %244 = vmatpush1.msra.mxu0 0.0
    %245 = vmatprep.subr.mxu0 0.0
    %246 = vmatpush1.msra.mxu0 0.0
    %247 = vmatprep.subr.mxu0 0.0
    %248 = vmatpush1.msra.mxu0 0.0
    %249 = vmatprep.subr.mxu0 0.0
    %250 = vmatpush1.msra.mxu0 0.0
    %251 = vmatprep.subr.mxu0 0.0
    %252 = vmatpush1.msra.mxu0 0.0
    %253 = vmatprep.subr.mxu0 0.0
    %254 = vmatpush1.msra.mxu0 0.0
    %255 = vmatprep.subr.mxu0 0.0
    %256 = vmatpush1.msra.mxu0 0.0
    %257 = vmatprep.subr.mxu0 0.0
    %258 = vmatpush1.msra.mxu0 %v225
    %259 = vmatprep.subr.mxu0 0.0
    %260 = vmatpush1.msra.mxu0 %v224
    %261 = vmatprep.subr.mxu0 0.0
    %262 = vmatpush1.msra.mxu0 %v223
    %263 = vmatprep.subr.mxu0 0.0
    %264 = vmatpush1.msra.mxu0 %v222
    %265 = vmatprep.subr.mxu0 0.0
    %266 = vmatpush1.msra.mxu0 %v221
    %267 = vmatprep.subr.mxu0 0.0
    %268 = vmatpush1.msra.mxu0 %v220
    %269 = vmatprep.subr.mxu0 0.0
    %270 = vmatpush1.msra.mxu0 %v219
    %271 = vmatprep.subr.mxu0 0.0
    %272 = vmatpush1.msra.mxu0 %v218
    %273 = vmatprep.subr.mxu0 0.0
    %274 = vmatpush2.msra.mxu0 0.0
    %275 = vmatprep.subr.mxu0 0.0
    %276 = vmatpush2.msra.mxu0 0.0
    %277 = vmatprep.subr.mxu0 0.0
    %278 = vmatpush2.msra.mxu0 0.0
    %279 = vmatprep.subr.mxu0 0.0
    %280 = vmatpush2.msra.mxu0 0.0
    %281 = vmatprep.subr.mxu0 0.0
    %282 = vmatpush2.msra.mxu0 0.0
    %283 = vmatprep.subr.mxu0 0.0
    %284 = vmatpush2.msra.mxu0 0.0
    %285 = vmatprep.subr.mxu0 0.0
    %286 = vmatpush2.msra.mxu0 0.0
    %287 = vmatprep.subr.mxu0 0.0
    %288 = vmatpush2.msra.mxu0 0.0
    %289 = vmatprep.subr.mxu0 0.0
    %290 = vmatpush2.msra.mxu0 0.0
    %291 = vmatprep.subr.mxu0 0.0
    %292 = vmatpush2.msra.mxu0 0.0
    %293 = vmatprep.subr.mxu0 0.0
    %294 = vmatpush2.msra.mxu0 0.0
    %295 = vmatprep.subr.mxu0 0.0
    %296 = vmatpush2.msra.mxu0 0.0
    %297 = vmatprep.subr.mxu0 0.0
    %298 = vmatpush2.msra.mxu0 0.0
    %299 = vmatprep.subr.mxu0 0.0
    %300 = vmatpush2.msra.mxu0 0.0
    %301 = vmatprep.subr.mxu0 0.0
    %302 = vmatpush2.msra.mxu0 0.0
    %303 = vmatprep.subr.mxu0 0.0
    %304 = vmatpush2.msra.mxu0 0.0
    %305 = vmatprep.mubr.f32.mxu0 0.0
    %306 = vmatmul.mubr.f32.gmra.mxu0 %v237
    %v307 = vpop.f32.mrf.mxu0
    %v308 = vadd.f32 %v229, %v307
    %v309 = vpop.f32.mrf.mxu0
    %310 = vmatprep.mubr.f32.mxu0 0.0
    %311 = vmatmul.mubr.f32.gmra.mxu0 %v239
    %v312 = vpop.f32.mrf.mxu0
    %v313 = vadd.f32 %v234, %v312
    %v314 = vpop.f32.mrf.mxu0
    %315 = vdwg.mxu0
    %316 = vset.pattern.permute.xlu0 65
    %317 = vperm.xlu0 %316, %v50
    %v318 = vpop.permute.xlu0 %317
    %v321 = vrot.slane %v40, 4
    %v323 = vmul.f32 %v318, %v321
    %v324 = vsub.f32 %v308, %v323
    %v325 = vlaneseq
    %v326 = vshrl.u32 %v325, 7
    %v327 = vsub.s32 0, %v326
    %v328 = vrot.slane %v41, %v327
    %v329 = vmul.f32 %v308, %v328
    %v331 = vrot.slane %v329, 4
    %v333 = vadd.f32 %v324, %v331
    %v334 = vlaneseq
    %v335 = vshrl.u32 %v334, 7
    %v336 = vsub.s32 1, %v335
    %v337 = vrot.slane %v41, %v336
    %v338 = vmul.f32 %v313, %v337
    %v339 = vadd.f32 %v333, %v338
    %vm340 = vcmask 125952
    %341 = vst.msk [vmem:[#allocation7] sm:$0xf] %vm340, %v339
    // Predicated region
    $region18: #{tpu_custom_call.1} parent=1 // pred_check
      _
    $region19: #{tpu_custom_call.1} parent=1 // pred_check_branch
      %343 = sbr.rel (0) target = $region21
    $region20: #{tpu_custom_call.1} parent=1 // pred_region
      %s345 = ssub.s32 64, 64
      %346 = vsyncadd [#allocation4], %s345
      %s348 = sshll.u32 [#allocation7], 4
      %s349 = int_to_ptr.vmem [resolvable:$true] %s348
      %351 = dma.vmem_to_hbm [thread:$0]  %s349, 64, %s2, [#allocation4]
    $region21: #{tpu_custom_call.1} parent=1 // pred_fallthru
      _
    // Predicated region
    $region22: #{tpu_custom_call.1} parent=1 // pred_check
      _
    $region23: #{tpu_custom_call.1} parent=1 // pred_check_branch
      %353 = sbr.rel (0) target = $region25
    $region24: #{tpu_custom_call.1} parent=1 // pred_region
      %354 = dma.done [#allocation4], 64
    $region25: #{tpu_custom_call.1} parent=1 // pred_fallthru
      _
    %355 = vsyncpa [#allocation3], 1
    %356 = vsyncpa [#allocation6], 1
    %357 = vsyncpa [#allocation4], 1

</llo_original>
